<compile_context>
chip_gen: v6e
topology: v6e:2x2x1
jax: 0.10.0
libtpu: 0.0.40
codegen_flags: <defaults>
</compile_context>

<pallas_src>
import jax
import jax.numpy as jnp
from jax.experimental import pallas as pl
from jax.experimental.pallas import tpu as pltpu

BATCH = 16
IN_DIM = 28 * 28          # 784 — divisible by 8 (sublane); used as a full-extent last dim
HID_DIM = 20
LANE = 128
SUBLANE = 8
HID_PAD = LANE            # hidden padded to one full lane width (lane-dense vregs / MXU)
MAX_BATCH_TILE = 256      # larger tiles for big batches; VMEM footprint stays tiny


def _round_up(x, m):
    return (x + m - 1) // m * m


def _autoencoder_kernel(x_ref, we_ref, be_ref, wd_ref, bd_ref, o_ref):
    # x_ref : (TM, 784)   f32   (cast to bf16 in-kernel)
    # we_ref: (784, 128)  bf16  encoder weight (in, out), hidden cols zero-padded 20->128
    # be_ref: (1, 128)    f32   encoder bias, zero-padded
    # wd_ref: (128, 784)  bf16  decoder weight (in, out), hidden rows zero-padded
    # bd_ref: (1, 784)    f32   decoder bias
    # o_ref : (TM, 784)   f32
    x = x_ref[...].astype(we_ref.dtype)                       # fused f32->bf16 cast (VPU)
    enc = jnp.dot(x, we_ref[...], preferred_element_type=jnp.float32) + be_ref[...]
    enc = enc.astype(wd_ref.dtype)                            # bf16 for the second MXU pass
    dec = jnp.dot(enc, wd_ref[...], preferred_element_type=jnp.float32) + bd_ref[...]
    o_ref[...] = dec.astype(o_ref.dtype)


def prepare_params(w_enc, b_enc, w_dec, b_dec, compute_dtype=jnp.bfloat16):
    """Pad the hidden dim to 128 lanes and cast MXU operands ONCE (not per forward call).

    The 784 axis is NOT padded (saves 12.5% encoder-weight DMA). Zero padding of the hidden
    dim is exact: padded encoder columns produce zeros, padded decoder rows contribute zero.
    """
    w_enc_p = jnp.zeros((IN_DIM, HID_PAD), compute_dtype).at[:, :HID_DIM].set(
        w_enc.astype(compute_dtype))
    b_enc_p = jnp.zeros((1, HID_PAD), jnp.float32).at[:, :HID_DIM].set(b_enc)
    w_dec_p = jnp.zeros((HID_PAD, IN_DIM), compute_dtype).at[:HID_DIM, :].set(
        w_dec.astype(compute_dtype))
    b_dec_p = jnp.asarray(b_dec, jnp.float32).reshape(1, IN_DIM)
    return w_enc_p, b_enc_p, w_dec_p, b_dec_p


def autoencoder_forward(x_nchw, w_enc_p, b_enc_p, w_dec_p, b_dec_p):
    """x_nchw: (B, 1, 28, 28) f32 -> (B, 1, 28, 28) f32. Params from prepare_params()."""
    b = x_nchw.shape[0]

    # Batch tile: multiple of 8 (f32 sublane); aim for >=2 grid steps so the "parallel"
    # batch axis can be sharded across v7x's 2 TensorCores even at small batch.
    tm = min(MAX_BATCH_TILE, max(SUBLANE, _round_up(pl.cdiv(b, 2), SUBLANE)))
    b_pad = _round_up(b, tm)

    x_flat = x_nchw.reshape(b, IN_DIM)              # metadata-only reshape, stays f32
    if b_pad != b:                                  # only materialize padding when needed
        x_flat = jnp.zeros((b_pad, IN_DIM), x_flat.dtype).at[:b].set(x_flat)

    bytes_accessed = (
        w_enc_p.size * w_enc_p.dtype.itemsize + w_dec_p.size * w_dec_p.dtype.itemsize
        + b_enc_p.size * 4 + b_dec_p.size * 4
        + b_pad * IN_DIM * 4 * 2)                   # input + output, f32
    flops = 2 * b_pad * (IN_DIM * HID_PAD + HID_PAD * IN_DIM)

    out_p = pl.pallas_call(
        _autoencoder_kernel,
        out_shape=jax.ShapeDtypeStruct((b_pad, IN_DIM), jnp.float32),
        grid=(b_pad // tm,),
        in_specs=[
            pl.BlockSpec((tm, IN_DIM), lambda i: (i, 0)),        # activations: blocked on batch
            pl.BlockSpec((IN_DIM, HID_PAD), lambda i: (0, 0)),   # params: VMEM-resident
            pl.BlockSpec((1, HID_PAD), lambda i: (0, 0)),
            pl.BlockSpec((HID_PAD, IN_DIM), lambda i: (0, 0)),
            pl.BlockSpec((1, IN_DIM), lambda i: (0, 0)),
        ],
        out_specs=pl.BlockSpec((tm, IN_DIM), lambda i: (i, 0)),
        compiler_params=pltpu.CompilerParams(
            dimension_semantics=("parallel",),       # shard batch tiles across v7x's 2 TCs
        ),
        cost_estimate=pl.CostEstimate(
            flops=flops, transcendentals=0, bytes_accessed=bytes_accessed),
    )(x_flat, w_enc_p, b_enc_p, w_dec_p, b_dec_p)

    out = out_p[:b] if b_pad != b else out_p
    return out.reshape(b, 1, 28, 28)                # metadata-only reshape


def init_params(key):
    """Deterministic init mimicking nn.Linear default: U(-1/sqrt(fan_in), +1/sqrt(fan_in))."""
    k1, k2, k3, k4 = jax.random.split(key, 4)
    bound_enc = 1.0 / jnp.sqrt(jnp.float32(IN_DIM))
    bound_dec = 1.0 / jnp.sqrt(jnp.float32(HID_DIM))
    # stored as (in_features, out_features) so the kernel computes x @ W
    w_enc = jax.random.uniform(k1, (IN_DIM, HID_DIM), jnp.float32, -bound_enc, bound_enc)
    b_enc = jax.random.uniform(k2, (1, HID_DIM), jnp.float32, -bound_enc, bound_enc)
    w_dec = jax.random.uniform(k3, (HID_DIM, IN_DIM), jnp.float32, -bound_dec, bound_dec)
    b_dec = jax.random.uniform(k4, (1, IN_DIM), jnp.float32, -bound_dec, bound_dec)
    return w_enc, b_enc, w_dec, b_dec


if __name__ == "__main__":
    key = jax.random.PRNGKey(0)
    k_x, k_p = jax.random.split(key)

    x = jax.random.normal(k_x, (BATCH, 1, 28, 28), jnp.float32)
    w_enc, b_enc, w_dec, b_dec = init_params(k_p)
    params = prepare_params(w_enc, b_enc, w_dec, b_dec)

    fwd = jax.jit(autoencoder_forward)
    out = jax.block_until_ready(fwd(x, *params))
    assert out.shape == (BATCH, 1, 28, 28)

    # Reference 1: identical arithmetic to the kernel (bf16 MXU operands, f32 accumulation).
    x_flat = x.reshape(BATCH, -1)
    enc = jnp.dot(x_flat.astype(jnp.bfloat16), w_enc.astype(jnp.bfloat16),
                  preferred_element_type=jnp.float32) + b_enc
    ref = jnp.dot(enc.astype(jnp.bfloat16), w_dec.astype(jnp.bfloat16),
                  preferred_element_type=jnp.float32) + b_dec
    ref = ref.reshape(BATCH, 1, 28, 28)
    assert jnp.allclose(out, ref, atol=2e-3, rtol=2e-3), float(jnp.max(jnp.abs(out - ref)))

    # Reference 2: pure-f32 nn.Linear semantics (loose tolerance: bf16 MXU operands are a
    # deliberate, documented choice).
    ref_f32 = ((x_flat @ w_enc + b_enc) @ w_dec + b_dec).reshape(BATCH, 1, 28, 28)
    assert jnp.allclose(out, ref_f32, atol=5e-2, rtol=5e-2), float(jnp.max(jnp.abs(out - ref_f32)))

    print("KERNEL_OK")
</pallas_src>

<mosaic_0001>
module attributes {stable_mosaic.version = 11 : i64} {
  func.func @_autoencoder_kernel(%arg0: i32, %arg1: memref<8x784xf32, #tpu.memory_space<vmem>>, %arg2: memref<784x128xbf16, #tpu.memory_space<vmem>>, %arg3: memref<1x128xf32, #tpu.memory_space<vmem>>, %arg4: memref<128x784xbf16, #tpu.memory_space<vmem>>, %arg5: memref<1x784xf32, #tpu.memory_space<vmem>>, %arg6: memref<8x784xf32, #tpu.memory_space<vmem>>) attributes {dimension_semantics = [#tpu.dimension_semantics<parallel>], iteration_bounds = array<i64: 2>, scalar_prefetch = 0 : i64, scratch_operands = 0 : i64, tpu.core_type = #tpu.core_type<tc>, window_params = [{transform_indices = @transform_0, window_bounds = array<i64: 8, 784>}, {pipeline_mode = #tpu.pipeline_mode<synchronous>, transform_indices = @transform_1, window_bounds = array<i64: 784, 128>}, {pipeline_mode = #tpu.pipeline_mode<synchronous>, transform_indices = @transform_2, window_bounds = array<i64: 1, 128>}, {pipeline_mode = #tpu.pipeline_mode<synchronous>, transform_indices = @transform_3, window_bounds = array<i64: 128, 784>}, {pipeline_mode = #tpu.pipeline_mode<synchronous>, transform_indices = @transform_4, window_bounds = array<i64: 1, 784>}, {transform_indices = @transform_5, window_bounds = array<i64: 8, 784>}]} {
    %c0 = arith.constant 0 : index
    %c0_0 = arith.constant 0 : index
    %0 = vector.load %arg1[%c0, %c0_0] : memref<8x784xf32, #tpu.memory_space<vmem>>, vector<8x784xf32>
    %1 = arith.truncf %0 : vector<8x784xf32> to vector<8x784xbf16>
    %c0_1 = arith.constant 0 : index
    %c0_2 = arith.constant 0 : index
    %2 = vector.load %arg2[%c0_1, %c0_2] : memref<784x128xbf16, #tpu.memory_space<vmem>>, vector<784x128xbf16>
    %cst = arith.constant dense<0.000000e+00> : vector<8x128xf32>
    %3 = tpu.matmul %1, %2, %cst {dimension_numbers = #tpu.dot_dimension_numbers<[1], [0], [0], [1], [0, 0, 1, 1], [], []>} : vector<8x784xbf16>, vector<784x128xbf16>, vector<8x128xf32> -> vector<8x128xf32>
    %c0_3 = arith.constant 0 : index
    %c0_4 = arith.constant 0 : index
    %4 = vector.load %arg3[%c0_3, %c0_4] : memref<1x128xf32, #tpu.memory_space<vmem>>, vector<1x128xf32>
    %5 = vector.broadcast %4 : vector<1x128xf32> to vector<8x128xf32>
    %6 = arith.addf %3, %5 : vector<8x128xf32>
    %7 = arith.truncf %6 : vector<8x128xf32> to vector<8x128xbf16>
    %c0_5 = arith.constant 0 : index
    %c0_6 = arith.constant 0 : index
    %8 = vector.load %arg4[%c0_5, %c0_6] : memref<128x784xbf16, #tpu.memory_space<vmem>>, vector<128x784xbf16>
    %cst_7 = arith.constant dense<0.000000e+00> : vector<8x784xf32>
    %9 = tpu.matmul %7, %8, %cst_7 {dimension_numbers = #tpu.dot_dimension_numbers<[1], [0], [0], [1], [0, 0, 1, 1], [], []>} : vector<8x128xbf16>, vector<128x784xbf16>, vector<8x784xf32> -> vector<8x784xf32>
    %c0_8 = arith.constant 0 : index
    %c0_9 = arith.constant 0 : index
    %10 = vector.load %arg5[%c0_8, %c0_9] : memref<1x784xf32, #tpu.memory_space<vmem>>, vector<1x784xf32>
    %11 = vector.broadcast %10 : vector<1x784xf32> to vector<8x784xf32>
    %12 = arith.addf %9, %11 : vector<8x784xf32>
    %c0_10 = arith.constant 0 : index
    %c0_11 = arith.constant 0 : index
    %13 = vector.load %arg6[%c0_10, %c0_11] : memref<8x784xf32, #tpu.memory_space<vmem>>, vector<8x784xf32>
    tpu.vector_store %arg6[%c0_10, %c0_11], %12 {strides = array<i32>} : memref<8x784xf32, #tpu.memory_space<vmem>>, vector<8x784xf32>,
    return
  }
  func.func @transform_0(%arg0: i32) -> (i32, i32) {
    %c0_i32 = arith.constant 0 : i32
    %c0_i32_0 = arith.constant 0 : i32
    return %arg0, %c0_i32 : i32, i32
  }
  func.func @transform_1(%arg0: i32) -> (i32, i32) {
    %c0_i32 = arith.constant 0 : i32
    %c0_i32_0 = arith.constant 0 : i32
    %c0_i32_1 = arith.constant 0 : i32
    return %c0_i32, %c0_i32_0 : i32, i32
  }
  func.func @transform_2(%arg0: i32) -> (i32, i32) {
    %c0_i32 = arith.constant 0 : i32
    %c0_i32_0 = arith.constant 0 : i32
    %c0_i32_1 = arith.constant 0 : i32
    return %c0_i32, %c0_i32_0 : i32, i32
  }
  func.func @transform_3(%arg0: i32) -> (i32, i32) {
    %c0_i32 = arith.constant 0 : i32
    %c0_i32_0 = arith.constant 0 : i32
    %c0_i32_1 = arith.constant 0 : i32
    return %c0_i32, %c0_i32_0 : i32, i32
  }
  func.func @transform_4(%arg0: i32) -> (i32, i32) {
    %c0_i32 = arith.constant 0 : i32
    %c0_i32_0 = arith.constant 0 : i32
    %c0_i32_1 = arith.constant 0 : i32
    return %c0_i32, %c0_i32_0 : i32, i32
  }
  func.func @transform_5(%arg0: i32) -> (i32, i32) {
    %c0_i32 = arith.constant 0 : i32
    %c0_i32_0 = arith.constant 0 : i32
    return %arg0, %c0_i32 : i32, i32
  }
}

</mosaic_0001>

<llo_original>
// kernel: autoencoder_forward.1
$region0: #{autoencoder_forward.1}
  #allocation0 [shape = 'u32[]', space=smem, size = 0x4, offset = 0x4, fixed_abs, tag = 'smem constant byte address 0x4 - core index']
  #allocation1 [shape = 'u32[144,128]{1,0:T(1,128)}', space=vmem, size = 0x12000, scoped, tag = 'internal scratch']
  %s0 = inlined_call_operand.vmem [shape: f32[16,784], index: 0, kind: input, shape index: {}]
  %s1 = inlined_call_operand.vmem [shape: bf16[784,128], index: 1, kind: input, shape index: {}]
  %s2 = inlined_call_operand.vmem [shape: f32[1,128], index: 2, kind: input, shape index: {}]
  %s3 = inlined_call_operand.vmem [shape: bf16[128,784], index: 3, kind: input, shape index: {}]
  %s4 = inlined_call_operand.vmem [shape: f32[1,784], index: 4, kind: input, shape index: {}]
  %s5 = inlined_call_operand.vmem [shape: f32[16,784], index: 5, kind: output, shape index: {}]
  %s6 = sld [smem:[#allocation0]]
  $region53: #{autoencoder_forward.1} parent=0
    _
  %s8 = ssub.s32 1, %s6
  %s9 = scalar_select 0, %s8, %s6
  loop: start=0, step=1, limit=4
  $region2: #{autoencoder_forward.1} parent=0 // loop_pre_header
    _
  $region3: #{autoencoder_forward.1} parent=0 // loop_header
    %s11 = sphi 0, %s15
    %p12 = scmp.ge.s32.totalorder %s11, 4
    %s21 = sphi 0, %s23
    %s24 = sphi 0, %s21
    %s25 = sphi 0, %s24
    %s41 = sphi 0, %s25
    %s45 = sphi 0, %s45
    %s47 = sphi 0, %s45
    %s48 = sphi 0, %s47
    %s62 = sphi 0, %s48
    %s66 = sphi 0, %s66
    %s68 = sphi 0, %s66
    %s69 = sphi 0, %s68
    %s83 = sphi 0, %s69
    %s87 = sphi 0, %s87
    %s89 = sphi 0, %s87
    %s90 = sphi 0, %s89
    %s104 = sphi 0, %s90
    %s108 = sphi 0, %s108
    %s110 = sphi 0, %s108
    %s111 = sphi 0, %s110
    %s125 = sphi 0, %s111
    %s131 = sphi 0, %s133
    %s134 = sphi 0, %s131
    %s135 = sphi 0, %s134
    %s151 = sphi 0, %s135
  $region4: #{autoencoder_forward.1} parent=0 // loop_header_branch
    %14 = sbr.rel (%p12) target = $region8
  $region5: #{autoencoder_forward.1} parent=0 // loop_body
    %s16 = ssub.s32 %s11, 1
    %s17 = ssub.s32 %s11, 2
    %s18 = sadd.s32 %s11, 1
    %s19 = ssub.s32 %s11, %s18
    %p20 = scmp.eq.s32.totalorder %s19, 0
    %s22 = sadd.s32 %s21, 1
    %s23 = scalar_select %p20, %s21, %s22
    %p26 = pneg %p20
    %p27 = scmp.eq.s32.totalorder %s11, 1
    %p28 = por %p26, %p27
    %p29 = scmp.ne.s32.totalorder %s21, %s24
    %p30 = scmp.eq.s32.totalorder %s11, 0
    %p31 = por %p29, %p30
    %p32 = scmp.ne.s32.totalorder %s21, %s24
    %p33 = scmp.eq.s32.totalorder %s16, 1
    %p34 = por %p32, %p33
    %p35 = scmp.ne.s32.totalorder %s24, %s25
    %p36 = scmp.eq.s32.totalorder %s16, 0
    %p37 = por %p35, %p36
    %p38 = scmp.ne.s32.totalorder %s24, %s25
    %p39 = scmp.eq.s32.totalorder %s17, 1
    %p40 = por %p38, %p39
    %p42 = scmp.ne.s32.totalorder %s25, %s41
    %p43 = scmp.eq.s32.totalorder %s17, 0
    %p44 = por %p42, %p43
    %s46 = sadd.s32 %s45, 1
    %p49 = scmp.eq.s32.totalorder %s11, 1
    %p50 = scmp.ne.s32.totalorder %s45, %s47
    %p51 = scmp.eq.s32.totalorder %s11, 0
    %p52 = por %p50, %p51
    %p53 = scmp.ne.s32.totalorder %s45, %s47
    %p54 = scmp.eq.s32.totalorder %s16, 1
    %p55 = por %p53, %p54
    %p56 = scmp.ne.s32.totalorder %s47, %s48
    %p57 = scmp.eq.s32.totalorder %s16, 0
    %p58 = por %p56, %p57
    %p59 = scmp.ne.s32.totalorder %s47, %s48
    %p60 = scmp.eq.s32.totalorder %s17, 1
    %p61 = por %p59, %p60
    %p63 = scmp.ne.s32.totalorder %s48, %s62
    %p64 = scmp.eq.s32.totalorder %s17, 0
    %p65 = por %p63, %p64
    %s67 = sadd.s32 %s66, 1
    %p70 = scmp.eq.s32.totalorder %s11, 1
    %p71 = scmp.ne.s32.totalorder %s66, %s68
    %p72 = scmp.eq.s32.totalorder %s11, 0
    %p73 = por %p71, %p72
    %p74 = scmp.ne.s32.totalorder %s66, %s68
    %p75 = scmp.eq.s32.totalorder %s16, 1
    %p76 = por %p74, %p75
    %p77 = scmp.ne.s32.totalorder %s68, %s69
    %p78 = scmp.eq.s32.totalorder %s16, 0
    %p79 = por %p77, %p78
    %p80 = scmp.ne.s32.totalorder %s68, %s69
    %p81 = scmp.eq.s32.totalorder %s17, 1
    %p82 = por %p80, %p81
    %p84 = scmp.ne.s32.totalorder %s69, %s83
    %p85 = scmp.eq.s32.totalorder %s17, 0
    %p86 = por %p84, %p85
    %s88 = sadd.s32 %s87, 1
    %p91 = scmp.eq.s32.totalorder %s11, 1
    %p92 = scmp.ne.s32.totalorder %s87, %s89
    %p93 = scmp.eq.s32.totalorder %s11, 0
    %p94 = por %p92, %p93
    %p95 = scmp.ne.s32.totalorder %s87, %s89
    %p96 = scmp.eq.s32.totalorder %s16, 1
    %p97 = por %p95, %p96
    %p98 = scmp.ne.s32.totalorder %s89, %s90
    %p99 = scmp.eq.s32.totalorder %s16, 0
    %p100 = por %p98, %p99
    %p101 = scmp.ne.s32.totalorder %s89, %s90
    %p102 = scmp.eq.s32.totalorder %s17, 1
    %p103 = por %p101, %p102
    %p105 = scmp.ne.s32.totalorder %s90, %s104
    %p106 = scmp.eq.s32.totalorder %s17, 0
    %p107 = por %p105, %p106
    %s109 = sadd.s32 %s108, 1
    %p112 = scmp.eq.s32.totalorder %s11, 1
    %p113 = scmp.ne.s32.totalorder %s108, %s110
    %p114 = scmp.eq.s32.totalorder %s11, 0
    %p115 = por %p113, %p114
    %p116 = scmp.ne.s32.totalorder %s108, %s110
    %p117 = scmp.eq.s32.totalorder %s16, 1
    %p118 = por %p116, %p117
    %p119 = scmp.ne.s32.totalorder %s110, %s111
    %p120 = scmp.eq.s32.totalorder %s16, 0
    %p121 = por %p119, %p120
    %p122 = scmp.ne.s32.totalorder %s110, %s111
    %p123 = scmp.eq.s32.totalorder %s17, 1
    %p124 = por %p122, %p123
    %p126 = scmp.ne.s32.totalorder %s111, %s125
    %p127 = scmp.eq.s32.totalorder %s17, 0
    %p128 = por %p126, %p127
    %s129 = ssub.s32 %s11, %s18
    %p130 = scmp.eq.s32.totalorder %s129, 0
    %s132 = sadd.s32 %s131, 1
    %s133 = scalar_select %p130, %s131, %s132
    %p136 = pneg %p130
    %p137 = scmp.eq.s32.totalorder %s11, 1
    %p138 = por %p136, %p137
    %p139 = scmp.ne.s32.totalorder %s131, %s134
    %p140 = scmp.eq.s32.totalorder %s11, 0
    %p141 = por %p139, %p140
    %p142 = scmp.ne.s32.totalorder %s131, %s134
    %p143 = scmp.eq.s32.totalorder %s16, 1
    %p144 = por %p142, %p143
    %p145 = scmp.ne.s32.totalorder %s134, %s135
    %p146 = scmp.eq.s32.totalorder %s16, 0
    %p147 = por %p145, %p146
    %p148 = scmp.ne.s32.totalorder %s134, %s135
    %p149 = scmp.eq.s32.totalorder %s17, 1
    %p150 = por %p148, %p149
    %p152 = scmp.ne.s32.totalorder %s135, %s151
    %p153 = scmp.eq.s32.totalorder %s17, 0
    %p154 = por %p152, %p153
    %p155 = scmp.le.s32.totalorder 1, %s11
    %p156 = scmp.lt.s32.totalorder %s11, 3
    %p157 = pnand %p155, %p156
    %p158 = pneg %p157
    // Predicated region
    $region9: #{autoencoder_forward.1} parent=5 // pred_check
      _
    $region10: #{autoencoder_forward.1} parent=5 // pred_check_branch
      %160 = sbr.rel (%p157) target = $region12
    $region11: #{autoencoder_forward.1} parent=5 // pred_region
      %s161 = ssub.s32 %s11, 1
      // Predicated region
      $region13: #{autoencoder_forward.1} parent=11 // pred_check
        %p162 = pneg %p58
      $region14: #{autoencoder_forward.1} parent=11 // pred_check_branch
        %164 = sbr.rel (%p162) target = $region16
      $region15: #{autoencoder_forward.1} parent=11 // pred_region
        _
      $region16: #{autoencoder_forward.1} parent=11 // pred_fallthru
        _
      // Predicated region
      $region17: #{autoencoder_forward.1} parent=11 // pred_check
        %p165 = pneg %p79
      $region18: #{autoencoder_forward.1} parent=11 // pred_check_branch
        %167 = sbr.rel (%p165) target = $region20
      $region19: #{autoencoder_forward.1} parent=11 // pred_region
        _
      $region20: #{autoencoder_forward.1} parent=11 // pred_fallthru
        _
      // Predicated region
      $region21: #{autoencoder_forward.1} parent=11 // pred_check
        %p168 = pneg %p100
      $region22: #{autoencoder_forward.1} parent=11 // pred_check_branch
        %170 = sbr.rel (%p168) target = $region24
      $region23: #{autoencoder_forward.1} parent=11 // pred_region
        _
      $region24: #{autoencoder_forward.1} parent=11 // pred_fallthru
        _
      // Predicated region
      $region25: #{autoencoder_forward.1} parent=11 // pred_check
        %p171 = pneg %p121
      $region26: #{autoencoder_forward.1} parent=11 // pred_check_branch
        %173 = sbr.rel (%p171) target = $region28
      $region27: #{autoencoder_forward.1} parent=11 // pred_region
        _
      $region28: #{autoencoder_forward.1} parent=11 // pred_fallthru
        _
    $region12: #{autoencoder_forward.1} parent=5 // pred_fallthru
      _
    %p174 = scmp.lt.s32.totalorder %s11, 2
    // Predicated region
    $region29: #{autoencoder_forward.1} parent=5 // pred_check
      %p175 = pneg %p174
    $region30: #{autoencoder_forward.1} parent=5 // pred_check_branch
      %177 = sbr.rel (%p175) target = $region32
    $region31: #{autoencoder_forward.1} parent=5 // pred_region
      // Predicated region
      $region33: #{autoencoder_forward.1} parent=31 // pred_check
        %p178 = pneg %p31
      $region34: #{autoencoder_forward.1} parent=31 // pred_check_branch
        %180 = sbr.rel (%p178) target = $region36
      $region35: #{autoencoder_forward.1} parent=31 // pred_region
        %p181 = scmp.lt.s32.totalorder %s11, 1
        %s182 = scalar_select %p181, %s11, 1
        %s183 = smul.addr %s182, 7
        %s184 = smul.addr %s183, 8
        %s185 = scalar_lea.vmem %s0, %s184
      $region36: #{autoencoder_forward.1} parent=31 // pred_fallthru
        _
    $region32: #{autoencoder_forward.1} parent=5 // pred_fallthru
      _
    %p186 = scmp.le.s32.totalorder 1, %s11
    %p187 = scmp.lt.s32.totalorder %s11, 3
    %p188 = pnand %p186, %p187
    %p189 = pneg %p188
    // Predicated region
    $region37: #{autoencoder_forward.1} parent=5 // pred_check
      _
    $region38: #{autoencoder_forward.1} parent=5 // pred_check_branch
      %191 = sbr.rel (%p188) target = $region40
    $region39: #{autoencoder_forward.1} parent=5 // pred_region
      %s192 = ssub.s32 %s11, 1
      %p193 = scmp.lt.s32.totalorder %s16, 1
      %s194 = scalar_select %p193, %s16, 1
      %s195 = smul.addr %s194, 7
      %s196 = smul.addr %s195, 8
      %s197 = scalar_lea.vmem %s0, %s196
      %p198 = pneg %p37
      %p199 = pneg %p34
      %p200 = pneg %p58
      %p201 = pneg %p55
      %p202 = pneg %p79
      %p203 = pneg %p76
      %p204 = pneg %p100
      %p205 = pneg %p97
      %p206 = pneg %p121
      %p207 = pneg %p118
      %p208 = pneg %p147
      %p209 = pneg %p144
      %p210 = scmp.lt.s32.totalorder %s16, 1
      %s211 = scalar_select %p210, %s16, 1
      %s212 = smul.addr %s211, 7
      %s213 = smul.addr %s212, 8
      %s214 = scalar_lea.vmem %s5, %s213
      %p215 = scmp.lt.s32.totalorder %s16, 1
      %s216 = scalar_select %p215, %s16, 1
      %s217 = smul.addr %s216, 7
      %s218 = smul.addr %s217, 8
      %s219 = scalar_lea.vmem %s0, %s218
      %p220 = scmp.lt.s32.totalorder %s16, 1
      %s221 = scalar_select %p220, %s16, 1
      %s222 = smul.addr %s221, 7
      %s223 = smul.addr %s222, 8
      %s224 = scalar_lea.vmem %s5, %s223
      %v226 = vld [vmem:[%s219] sm:$0xff]
      %v227 = vld [vmem:[%s219 + $0x8] sm:$0xff]
      %v228 = vld [vmem:[%s219 + $0x10] sm:$0xff]
      %v229 = vld [vmem:[%s219 + $0x18] sm:$0xff]
      %v230 = vld [vmem:[%s219 + $0x20] sm:$0xff]
      %v231 = vld [vmem:[%s219 + $0x28] sm:$0xff]
      %v232 = vld [vmem:[%s219 + $0x30] sm:$0xff]
      %v233 = vpack.c.bf16 %v226, %v226
      %v234 = vpack.c.bf16 %v227, %v227
      %v235 = vpack.c.bf16 %v228, %v228
      %v236 = vpack.c.bf16 %v229, %v229
      %v237 = vpack.c.bf16 %v230, %v230
      %v238 = vpack.c.bf16 %v231, %v231
      %v239 = vpack.c.bf16 %v232, %v232
      %v240 = vld [vmem:[%s1] sm:$0xf]
      %v241 = vld [vmem:[%s1 + $0x4] sm:$0xf]
      %v242 = vld [vmem:[%s1 + $0x8] sm:$0xf]
      %v243 = vld [vmem:[%s1 + $0xc] sm:$0xf]
      %v244 = vld [vmem:[%s1 + $0x10] sm:$0xf]
      %v245 = vld [vmem:[%s1 + $0x14] sm:$0xf]
      %v246 = vld [vmem:[%s1 + $0x18] sm:$0xf]
      %v247 = vld [vmem:[%s1 + $0x1c] sm:$0xf]
      %v248 = vld [vmem:[%s1 + $0x20] sm:$0xf]
      %v249 = vld [vmem:[%s1 + $0x24] sm:$0xf]
      %v250 = vld [vmem:[%s1 + $0x28] sm:$0xf]
      %v251 = vld [vmem:[%s1 + $0x2c] sm:$0xf]
      %v252 = vld [vmem:[%s1 + $0x30] sm:$0xf]
      %v253 = vld [vmem:[%s1 + $0x34] sm:$0xf]
      %v254 = vld [vmem:[%s1 + $0x38] sm:$0xf]
      %v255 = vld [vmem:[%s1 + $0x3c] sm:$0xf]
      %v256 = vld [vmem:[%s1 + $0x40] sm:$0xf]
      %v257 = vld [vmem:[%s1 + $0x44] sm:$0xf]
      %v258 = vld [vmem:[%s1 + $0x48] sm:$0xf]
      %v259 = vld [vmem:[%s1 + $0x4c] sm:$0xf]
      %v260 = vld [vmem:[%s1 + $0x50] sm:$0xf]
      %v261 = vld [vmem:[%s1 + $0x54] sm:$0xf]
      %v262 = vld [vmem:[%s1 + $0x58] sm:$0xf]
      %v263 = vld [vmem:[%s1 + $0x5c] sm:$0xf]
      %v264 = vld [vmem:[%s1 + $0x60] sm:$0xf]
      %v265 = vld [vmem:[%s1 + $0x64] sm:$0xf]
      %v266 = vld [vmem:[%s1 + $0x68] sm:$0xf]
      %v267 = vld [vmem:[%s1 + $0x6c] sm:$0xf]
      %v268 = vld [vmem:[%s1 + $0x70] sm:$0xf]
      %v269 = vld [vmem:[%s1 + $0x74] sm:$0xf]
      %v270 = vld [vmem:[%s1 + $0x78] sm:$0xf]
      %v271 = vld [vmem:[%s1 + $0x7c] sm:$0xf]
      %v272 = vld [vmem:[%s1 + $0x80] sm:$0xf]
      %v273 = vld [vmem:[%s1 + $0x84] sm:$0xf]
      %v274 = vld [vmem:[%s1 + $0x88] sm:$0xf]
      %v275 = vld [vmem:[%s1 + $0x8c] sm:$0xf]
      %v276 = vld [vmem:[%s1 + $0x90] sm:$0xf]
      %v277 = vld [vmem:[%s1 + $0x94] sm:$0xf]
      %v278 = vld [vmem:[%s1 + $0x98] sm:$0xf]
      %v279 = vld [vmem:[%s1 + $0x9c] sm:$0xf]
      %v280 = vld [vmem:[%s1 + $0xa0] sm:$0xf]
      %v281 = vld [vmem:[%s1 + $0xa4] sm:$0xf]
      %v282 = vld [vmem:[%s1 + $0xa8] sm:$0xf]
      %v283 = vld [vmem:[%s1 + $0xac] sm:$0xf]
      %v284 = vld [vmem:[%s1 + $0xb0] sm:$0xf]
      %v285 = vld [vmem:[%s1 + $0xb4] sm:$0xf]
      %v286 = vld [vmem:[%s1 + $0xb8] sm:$0xf]
      %v287 = vld [vmem:[%s1 + $0xbc] sm:$0xf]
      %v288 = vld [vmem:[%s1 + $0xc0] sm:$0xf]
      %v289 = vld [vmem:[%s1 + $0xc4] sm:$0xf]
      %v290 = vld [vmem:[%s1 + $0xc8] sm:$0xf]
      %v291 = vld [vmem:[%s1 + $0xcc] sm:$0xf]
      %v292 = vld [vmem:[%s1 + $0xd0] sm:$0xf]
      %v293 = vld [vmem:[%s1 + $0xd4] sm:$0xf]
      %v294 = vld [vmem:[%s1 + $0xd8] sm:$0xf]
      %v295 = vld [vmem:[%s1 + $0xdc] sm:$0xf]
      %v296 = vld [vmem:[%s1 + $0xe0] sm:$0xf]
      %v297 = vld [vmem:[%s1 + $0xe4] sm:$0xf]
      %v298 = vld [vmem:[%s1 + $0xe8] sm:$0xf]
      %v299 = vld [vmem:[%s1 + $0xec] sm:$0xf]
      %v300 = vld [vmem:[%s1 + $0xf0] sm:$0xf]
      %v301 = vld [vmem:[%s1 + $0xf4] sm:$0xf]
      %v302 = vld [vmem:[%s1 + $0xf8] sm:$0xf]
      %v303 = vld [vmem:[%s1 + $0xfc] sm:$0xf]
      %v304 = vld [vmem:[%s1 + $0x100] sm:$0xf]
      %v305 = vld [vmem:[%s1 + $0x104] sm:$0xf]
      %v306 = vld [vmem:[%s1 + $0x108] sm:$0xf]
      %v307 = vld [vmem:[%s1 + $0x10c] sm:$0xf]
      %v308 = vld [vmem:[%s1 + $0x110] sm:$0xf]
      %v309 = vld [vmem:[%s1 + $0x114] sm:$0xf]
      %v310 = vld [vmem:[%s1 + $0x118] sm:$0xf]
      %v311 = vld [vmem:[%s1 + $0x11c] sm:$0xf]
      %v312 = vld [vmem:[%s1 + $0x120] sm:$0xf]
      %v313 = vld [vmem:[%s1 + $0x124] sm:$0xf]
      %v314 = vld [vmem:[%s1 + $0x128] sm:$0xf]
      %v315 = vld [vmem:[%s1 + $0x12c] sm:$0xf]
      %v316 = vld [vmem:[%s1 + $0x130] sm:$0xf]
      %v317 = vld [vmem:[%s1 + $0x134] sm:$0xf]
      %v318 = vld [vmem:[%s1 + $0x138] sm:$0xf]
      %v319 = vld [vmem:[%s1 + $0x13c] sm:$0xf]
      %v320 = vld [vmem:[%s1 + $0x140] sm:$0xf]
      %v321 = vld [vmem:[%s1 + $0x144] sm:$0xf]
      %v322 = vld [vmem:[%s1 + $0x148] sm:$0xf]
      %v323 = vld [vmem:[%s1 + $0x14c] sm:$0xf]
      %v324 = vld [vmem:[%s1 + $0x150] sm:$0xf]
      %v325 = vld [vmem:[%s1 + $0x154] sm:$0xf]
      %v326 = vld [vmem:[%s1 + $0x158] sm:$0xf]
      %v327 = vld [vmem:[%s1 + $0x15c] sm:$0xf]
      %v328 = vld [vmem:[%s1 + $0x160] sm:$0xf]
      %v329 = vld [vmem:[%s1 + $0x164] sm:$0xf]
      %v330 = vld [vmem:[%s1 + $0x168] sm:$0xf]
      %v331 = vld [vmem:[%s1 + $0x16c] sm:$0xf]
      %v332 = vld [vmem:[%s1 + $0x170] sm:$0xf]
      %v333 = vld [vmem:[%s1 + $0x174] sm:$0xf]
      %v334 = vld [vmem:[%s1 + $0x178] sm:$0xf]
      %v335 = vld [vmem:[%s1 + $0x17c] sm:$0xf]
      %v336 = vld [vmem:[%s1 + $0x180] sm:$0xf]
      %v337 = vld [vmem:[%s1 + $0x184] sm:$0xf]
      %v338 = vld [vmem:[%s2] sm:$0x1]
      %v340 = vlaneseq
      %v341 = vshrl.u32 %v340, 7
      %v342 = vsub.s32 0, %v341
      %v343 = vrot.slane %v338, %v342
      %v443 = vunpack.c.l.b16 %v240
      %v444 = vunpack.c.l.b16 %v241
      %v445 = vunpack.c.l.b16 %v242
      %v446 = vunpack.c.l.b16 %v243
      %v447 = vunpack.c.l.b16 %v244
      %v448 = vunpack.c.l.b16 %v245
      %v449 = vunpack.c.l.b16 %v246
      %v450 = vunpack.c.l.b16 %v247
      %v451 = vunpack.c.l.b16 %v248
      %v452 = vunpack.c.l.b16 %v249
      %v453 = vunpack.c.l.b16 %v250
      %v454 = vunpack.c.l.b16 %v251
      %v455 = vunpack.c.l.b16 %v252
      %v456 = vunpack.c.l.b16 %v253
      %v457 = vunpack.c.l.b16 %v254
      %v458 = vunpack.c.l.b16 %v255
      %v459 = vunpack.c.l.b16 %v256
      %v460 = vunpack.c.l.b16 %v257
      %v461 = vunpack.c.l.b16 %v258
      %v462 = vunpack.c.l.b16 %v259
      %v463 = vunpack.c.l.b16 %v260
      %v464 = vunpack.c.l.b16 %v261
      %v465 = vunpack.c.l.b16 %v262
      %v466 = vunpack.c.l.b16 %v263
      %v467 = vunpack.c.l.b16 %v264
      %v468 = vunpack.c.l.b16 %v265
      %v469 = vunpack.c.l.b16 %v266
      %v470 = vunpack.c.l.b16 %v267
      %v471 = vunpack.c.l.b16 %v268
      %v472 = vunpack.c.l.b16 %v269
      %v473 = vunpack.c.l.b16 %v270
      %v474 = vunpack.c.l.b16 %v271
      %v475 = vunpack.c.l.b16 %v272
      %v476 = vunpack.c.l.b16 %v273
      %v477 = vunpack.c.l.b16 %v274
      %v478 = vunpack.c.l.b16 %v275
      %v479 = vunpack.c.l.b16 %v276
      %v480 = vunpack.c.l.b16 %v277
      %v481 = vunpack.c.l.b16 %v278
      %v482 = vunpack.c.l.b16 %v279
      %v483 = vunpack.c.l.b16 %v280
      %v484 = vunpack.c.l.b16 %v281
      %v485 = vunpack.c.l.b16 %v282
      %v486 = vunpack.c.l.b16 %v283
      %v487 = vunpack.c.l.b16 %v284
      %v488 = vunpack.c.l.b16 %v285
      %v489 = vunpack.c.l.b16 %v286
      %v490 = vunpack.c.l.b16 %v287
      %v491 = vunpack.c.l.b16 %v288
      %v492 = vunpack.c.l.b16 %v289
      %v493 = vunpack.c.l.b16 %v290
      %v494 = vunpack.c.l.b16 %v291
      %v495 = vunpack.c.l.b16 %v292
      %v496 = vunpack.c.l.b16 %v293
      %v497 = vunpack.c.l.b16 %v294
      %v498 = vunpack.c.l.b16 %v295
      %v499 = vunpack.c.l.b16 %v296
      %v500 = vunpack.c.l.b16 %v297
      %v501 = vunpack.c.l.b16 %v298
      %v502 = vunpack.c.l.b16 %v299
      %v503 = vunpack.c.l.b16 %v300
      %v504 = vunpack.c.l.b16 %v301
      %v505 = vunpack.c.l.b16 %v302
      %v506 = vunpack.c.l.b16 %v303
      %v507 = vunpack.c.l.b16 %v304
      %v508 = vunpack.c.l.b16 %v305
      %v509 = vunpack.c.l.b16 %v306
      %v510 = vunpack.c.l.b16 %v307
      %v511 = vunpack.c.l.b16 %v308
      %v512 = vunpack.c.l.b16 %v309
      %v513 = vunpack.c.l.b16 %v310
      %v514 = vunpack.c.l.b16 %v311
      %v515 = vunpack.c.l.b16 %v312
      %v516 = vunpack.c.l.b16 %v313
      %v517 = vunpack.c.l.b16 %v314
      %v518 = vunpack.c.l.b16 %v315
      %v519 = vunpack.c.l.b16 %v316
      %v520 = vunpack.c.l.b16 %v317
      %v521 = vunpack.c.l.b16 %v318
      %v522 = vunpack.c.l.b16 %v319
      %v523 = vunpack.c.l.b16 %v320
      %v524 = vunpack.c.l.b16 %v321
      %v525 = vunpack.c.l.b16 %v322
      %v526 = vunpack.c.l.b16 %v323
      %v527 = vunpack.c.l.b16 %v324
      %v528 = vunpack.c.l.b16 %v325
      %v529 = vunpack.c.l.b16 %v326
      %v530 = vunpack.c.l.b16 %v327
      %v531 = vunpack.c.l.b16 %v328
      %v532 = vunpack.c.l.b16 %v329
      %v533 = vunpack.c.l.b16 %v330
      %v534 = vunpack.c.l.b16 %v331
      %v535 = vunpack.c.l.b16 %v332
      %v536 = vunpack.c.l.b16 %v333
      %v537 = vunpack.c.l.b16 %v334
      %v538 = vunpack.c.l.b16 %v335
      %v539 = vunpack.c.l.b16 %v336
      %v540 = vunpack.c.l.b16 %v337
      %v541 = vpack.c.b16 %v444, %v443
      %v542 = vpack.c.b16 %v446, %v445
      %v543 = vpack.c.b16 %v448, %v447
      %v544 = vpack.c.b16 %v450, %v449
      %v545 = vpack.c.b16 %v452, %v451
      %v546 = vpack.c.b16 %v454, %v453
      %v547 = vpack.c.b16 %v456, %v455
      %v548 = vpack.c.b16 %v458, %v457
      %v549 = vpack.c.b16 %v460, %v459
      %v550 = vpack.c.b16 %v462, %v461
      %v551 = vpack.c.b16 %v464, %v463
      %v552 = vpack.c.b16 %v466, %v465
      %v553 = vpack.c.b16 %v468, %v467
      %v554 = vpack.c.b16 %v470, %v469
      %v555 = vpack.c.b16 %v472, %v471
      %v556 = vpack.c.b16 %v474, %v473
      %v557 = vpack.c.b16 %v476, %v475
      %v558 = vpack.c.b16 %v478, %v477
      %v559 = vpack.c.b16 %v480, %v479
      %v560 = vpack.c.b16 %v482, %v481
      %v561 = vpack.c.b16 %v484, %v483
      %v562 = vpack.c.b16 %v486, %v485
      %v563 = vpack.c.b16 %v488, %v487
      %v564 = vpack.c.b16 %v490, %v489
      %v565 = vpack.c.b16 %v492, %v491
      %v566 = vpack.c.b16 %v494, %v493
      %v567 = vpack.c.b16 %v496, %v495
      %v568 = vpack.c.b16 %v498, %v497
      %v569 = vpack.c.b16 %v500, %v499
      %v570 = vpack.c.b16 %v502, %v501
      %v571 = vpack.c.b16 %v504, %v503
      %v572 = vpack.c.b16 %v506, %v505
      %v573 = vpack.c.b16 %v508, %v507
      %v574 = vpack.c.b16 %v510, %v509
      %v575 = vpack.c.b16 %v512, %v511
      %v576 = vpack.c.b16 %v514, %v513
      %v577 = vpack.c.b16 %v516, %v515
      %v578 = vpack.c.b16 %v518, %v517
      %v579 = vpack.c.b16 %v520, %v519
      %v580 = vpack.c.b16 %v522, %v521
      %v581 = vpack.c.b16 %v524, %v523
      %v582 = vpack.c.b16 %v526, %v525
      %v583 = vpack.c.b16 %v528, %v527
      %v584 = vpack.c.b16 %v530, %v529
      %v585 = vpack.c.b16 %v532, %v531
      %v586 = vpack.c.b16 %v534, %v533
      %v587 = vpack.c.b16 %v536, %v535
      %v588 = vpack.c.b16 %v538, %v537
      %v589 = vpack.c.b16 %v540, %v539
      %vm639 = vcmask 130048
      %v641 = vsel %vm639, %v239, 0
      %643 = vmatprep.subr.bf16.mxu0 0
      %644 = vmatpush1.bf16.msra.mxu0 %v548
      %645 = vmatprep.subr.bf16.mxu0 0
      %646 = vmatpush1.bf16.msra.mxu0 %v547
      %647 = vmatprep.subr.bf16.mxu0 0
      %648 = vmatpush1.bf16.msra.mxu0 %v546
      %649 = vmatprep.subr.bf16.mxu0 0
      %650 = vmatpush1.bf16.msra.mxu0 %v545
      %651 = vmatprep.subr.bf16.mxu0 0
      %652 = vmatpush1.bf16.msra.mxu0 %v544
      %653 = vmatprep.subr.bf16.mxu0 0
      %654 = vmatpush1.bf16.msra.mxu0 %v543
      %655 = vmatprep.subr.bf16.mxu0 0
      %656 = vmatpush1.bf16.msra.mxu0 %v542
      %657 = vmatprep.subr.bf16.mxu0 0
      %658 = vmatpush1.bf16.msra.mxu0 %v541
      %659 = vmatprep.subr.bf16.mxu0 0
      %660 = vmatpush2.bf16.msra.mxu0 %v556
      %661 = vmatprep.subr.bf16.mxu0 0
      %662 = vmatpush2.bf16.msra.mxu0 %v555
      %663 = vmatprep.subr.bf16.mxu0 0
      %664 = vmatpush2.bf16.msra.mxu0 %v554
      %665 = vmatprep.subr.bf16.mxu0 0
      %666 = vmatpush2.bf16.msra.mxu0 %v553
      %667 = vmatprep.subr.bf16.mxu0 0
      %668 = vmatpush2.bf16.msra.mxu0 %v552
      %669 = vmatprep.subr.bf16.mxu0 0
      %670 = vmatpush2.bf16.msra.mxu0 %v551
      %671 = vmatprep.subr.bf16.mxu0 0
      %672 = vmatpush2.bf16.msra.mxu0 %v550
      %673 = vmatprep.subr.bf16.mxu0 0
      %674 = vmatpush2.bf16.msra.mxu0 %v549
      %675 = vmatprep.mubr.bf16.mxu0 %v234
      %676 = vmatmul.mubr.bf16.gmra.mxu0 %v233
      %v677 = vpop.f32.mrf.mxu0
      %v678 = vadd.f32 %v343, %v677
      %v679 = vpop.f32.mrf.mxu0
      %v680 = vpop.f32.mrf.mxu0
      %v681 = vpop.f32.mrf.mxu0
      %682 = vdwg.mxu0
      %683 = vmatprep.subr.bf16.mxu0 0
      %684 = vmatpush1.bf16.msra.mxu0 %v564
      %685 = vmatprep.subr.bf16.mxu0 0
      %686 = vmatpush1.bf16.msra.mxu0 %v563
      %687 = vmatprep.subr.bf16.mxu0 0
      %688 = vmatpush1.bf16.msra.mxu0 %v562
      %689 = vmatprep.subr.bf16.mxu0 0
      %690 = vmatpush1.bf16.msra.mxu0 %v561
      %691 = vmatprep.subr.bf16.mxu0 0
      %692 = vmatpush1.bf16.msra.mxu0 %v560
      %693 = vmatprep.subr.bf16.mxu0 0
      %694 = vmatpush1.bf16.msra.mxu0 %v559
      %695 = vmatprep.subr.bf16.mxu0 0
      %696 = vmatpush1.bf16.msra.mxu0 %v558
      %697 = vmatprep.subr.bf16.mxu0 0
      %698 = vmatpush1.bf16.msra.mxu0 %v557
      %699 = vmatprep.subr.bf16.mxu0 0
      %700 = vmatpush2.bf16.msra.mxu0 %v572
      %701 = vmatprep.subr.bf16.mxu0 0
      %702 = vmatpush2.bf16.msra.mxu0 %v571
      %703 = vmatprep.subr.bf16.mxu0 0
      %704 = vmatpush2.bf16.msra.mxu0 %v570
      %705 = vmatprep.subr.bf16.mxu0 0
      %706 = vmatpush2.bf16.msra.mxu0 %v569
      %707 = vmatprep.subr.bf16.mxu0 0
      %708 = vmatpush2.bf16.msra.mxu0 %v568
      %709 = vmatprep.subr.bf16.mxu0 0
      %710 = vmatpush2.bf16.msra.mxu0 %v567
      %711 = vmatprep.subr.bf16.mxu0 0
      %712 = vmatpush2.bf16.msra.mxu0 %v566
      %713 = vmatprep.subr.bf16.mxu0 0
      %714 = vmatpush2.bf16.msra.mxu0 %v565
      %715 = vmatprep.mubr.bf16.mxu0 %v236
      %716 = vmatmul.mubr.bf16.gmra.mxu0 %v235
      %v717 = vpop.f32.mrf.mxu0
      %v718 = vadd.f32 %v678, %v717
      %v719 = vpop.f32.mrf.mxu0
      %v720 = vpop.f32.mrf.mxu0
      %v721 = vpop.f32.mrf.mxu0
      %722 = vdwg.mxu0
      %723 = vmatprep.subr.bf16.mxu0 0
      %724 = vmatpush1.bf16.msra.mxu0 %v580
      %725 = vmatprep.subr.bf16.mxu0 0
      %726 = vmatpush1.bf16.msra.mxu0 %v579
      %727 = vmatprep.subr.bf16.mxu0 0
      %728 = vmatpush1.bf16.msra.mxu0 %v578
      %729 = vmatprep.subr.bf16.mxu0 0
      %730 = vmatpush1.bf16.msra.mxu0 %v577
      %731 = vmatprep.subr.bf16.mxu0 0
      %732 = vmatpush1.bf16.msra.mxu0 %v576
      %733 = vmatprep.subr.bf16.mxu0 0
      %734 = vmatpush1.bf16.msra.mxu0 %v575
      %735 = vmatprep.subr.bf16.mxu0 0
      %736 = vmatpush1.bf16.msra.mxu0 %v574
      %737 = vmatprep.subr.bf16.mxu0 0
      %738 = vmatpush1.bf16.msra.mxu0 %v573
      %739 = vmatprep.subr.bf16.mxu0 0
      %740 = vmatpush2.bf16.msra.mxu0 %v588
      %741 = vmatprep.subr.bf16.mxu0 0
      %742 = vmatpush2.bf16.msra.mxu0 %v587
      %743 = vmatprep.subr.bf16.mxu0 0
      %744 = vmatpush2.bf16.msra.mxu0 %v586
      %745 = vmatprep.subr.bf16.mxu0 0
      %746 = vmatpush2.bf16.msra.mxu0 %v585
      %747 = vmatprep.subr.bf16.mxu0 0
      %748 = vmatpush2.bf16.msra.mxu0 %v584
      %749 = vmatprep.subr.bf16.mxu0 0
      %750 = vmatpush2.bf16.msra.mxu0 %v583
      %751 = vmatprep.subr.bf16.mxu0 0
      %752 = vmatpush2.bf16.msra.mxu0 %v582
      %753 = vmatprep.subr.bf16.mxu0 0
      %754 = vmatpush2.bf16.msra.mxu0 %v581
      %755 = vmatprep.mubr.bf16.mxu0 %v238
      %756 = vmatmul.mubr.bf16.gmra.mxu0 %v237
      %v757 = vpop.f32.mrf.mxu0
      %v758 = vadd.f32 %v718, %v757
      %v759 = vpop.f32.mrf.mxu0
      %v760 = vpop.f32.mrf.mxu0
      %v761 = vpop.f32.mrf.mxu0
      %762 = vdwg.mxu0
      %763 = vmatprep.subr.bf16.mxu0 0
      %764 = vmatpush1.bf16.msra.mxu0 0
      %765 = vmatprep.subr.bf16.mxu0 0
      %766 = vmatpush1.bf16.msra.mxu0 0
      %767 = vmatprep.subr.bf16.mxu0 0
      %768 = vmatpush1.bf16.msra.mxu0 0
      %769 = vmatprep.subr.bf16.mxu0 0
      %770 = vmatpush1.bf16.msra.mxu0 0
      %771 = vmatprep.subr.bf16.mxu0 0
      %772 = vmatpush1.bf16.msra.mxu0 0
      %773 = vmatprep.subr.bf16.mxu0 0
      %774 = vmatpush1.bf16.msra.mxu0 0
      %775 = vmatprep.subr.bf16.mxu0 0
      %776 = vmatpush1.bf16.msra.mxu0 0
      %777 = vmatprep.subr.bf16.mxu0 0
      %778 = vmatpush1.bf16.msra.mxu0 %v589
      %779 = vmatprep.subr.bf16.mxu0 0
      %780 = vmatpush2.bf16.msra.mxu0 0
      %781 = vmatprep.subr.bf16.mxu0 0
      %782 = vmatpush2.bf16.msra.mxu0 0
      %783 = vmatprep.subr.bf16.mxu0 0
      %784 = vmatpush2.bf16.msra.mxu0 0
      %785 = vmatprep.subr.bf16.mxu0 0
      %786 = vmatpush2.bf16.msra.mxu0 0
      %787 = vmatprep.subr.bf16.mxu0 0
      %788 = vmatpush2.bf16.msra.mxu0 0
      %789 = vmatprep.subr.bf16.mxu0 0
      %790 = vmatpush2.bf16.msra.mxu0 0
      %791 = vmatprep.subr.bf16.mxu0 0
      %792 = vmatpush2.bf16.msra.mxu0 0
      %793 = vmatprep.subr.bf16.mxu0 0
      %794 = vmatpush2.bf16.msra.mxu0 0
      %795 = vmatprep.mubr.bf16.mxu0 0
      %796 = vmatmul.mubr.bf16.gmra.mxu0 %v641
      %v797 = vpop.f32.mrf.mxu0
      %v798 = vadd.f32 %v758, %v797
      %v799 = vpop.f32.mrf.mxu0
      %v800 = vpop.f32.mrf.mxu0
      %v801 = vpop.f32.mrf.mxu0
      %802 = vdwg.mxu0
      %v803 = vpack.c.bf16 %v798, %v798
      %v804 = vld [vmem:[%s3] sm:$0xff]
      %v805 = vld [vmem:[%s3 + $0x8] sm:$0xff]
      %v806 = vld [vmem:[%s3 + $0x10] sm:$0xff]
      %v807 = vld [vmem:[%s3 + $0x18] sm:$0xf]
      %v808 = vld [vmem:[%s3 + $0x1c] sm:$0xff]
      %v809 = vld [vmem:[%s3 + $0x24] sm:$0xff]
      %v810 = vld [vmem:[%s3 + $0x2c] sm:$0xff]
      %v811 = vld [vmem:[%s3 + $0x34] sm:$0xf]
      %v812 = vld [vmem:[%s3 + $0x38] sm:$0xff]
      %v813 = vld [vmem:[%s3 + $0x40] sm:$0xff]
      %v814 = vld [vmem:[%s3 + $0x48] sm:$0xff]
      %v815 = vld [vmem:[%s3 + $0x50] sm:$0xf]
      %v816 = vld [vmem:[%s3 + $0x54] sm:$0xff]
      %v817 = vld [vmem:[%s3 + $0x5c] sm:$0xff]
      %v818 = vld [vmem:[%s3 + $0x64] sm:$0xff]
      %v819 = vld [vmem:[%s3 + $0x6c] sm:$0xf]
      %v820 = vld [vmem:[%s3 + $0x70] sm:$0xff]
      %v821 = vld [vmem:[%s3 + $0x78] sm:$0xff]
      %v822 = vld [vmem:[%s3 + $0x80] sm:$0xff]
      %v823 = vld [vmem:[%s3 + $0x88] sm:$0xf]
      %v824 = vld [vmem:[%s3 + $0x8c] sm:$0xff]
      %v825 = vld [vmem:[%s3 + $0x94] sm:$0xff]
      %v826 = vld [vmem:[%s3 + $0x9c] sm:$0xff]
      %v827 = vld [vmem:[%s3 + $0xa4] sm:$0xf]
      %v828 = vld [vmem:[%s3 + $0xa8] sm:$0xff]
      %v829 = vld [vmem:[%s3 + $0xb0] sm:$0xff]
      %v830 = vld [vmem:[%s3 + $0xb8] sm:$0xff]
      %v831 = vld [vmem:[%s3 + $0xc0] sm:$0xf]
      %v832 = vld [vmem:[%s3 + $0xc4] sm:$0xff]
      %v833 = vld [vmem:[%s3 + $0xcc] sm:$0xff]
      %v834 = vld [vmem:[%s3 + $0xd4] sm:$0xff]
      %v835 = vld [vmem:[%s3 + $0xdc] sm:$0xf]
      %v836 = vld [vmem:[%s3 + $0xe0] sm:$0xff]
      %v837 = vld [vmem:[%s3 + $0xe8] sm:$0xff]
      %v838 = vld [vmem:[%s3 + $0xf0] sm:$0xff]
      %v839 = vld [vmem:[%s3 + $0xf8] sm:$0xf]
      %v840 = vld [vmem:[%s3 + $0xfc] sm:$0xff]
      %v841 = vld [vmem:[%s3 + $0x104] sm:$0xff]
      %v842 = vld [vmem:[%s3 + $0x10c] sm:$0xff]
      %v843 = vld [vmem:[%s3 + $0x114] sm:$0xf]
      %v844 = vld [vmem:[%s3 + $0x118] sm:$0xff]
      %v845 = vld [vmem:[%s3 + $0x120] sm:$0xff]
      %v846 = vld [vmem:[%s3 + $0x128] sm:$0xff]
      %v847 = vld [vmem:[%s3 + $0x130] sm:$0xf]
      %v848 = vld [vmem:[%s3 + $0x134] sm:$0xff]
      %v849 = vld [vmem:[%s3 + $0x13c] sm:$0xff]
      %v850 = vld [vmem:[%s3 + $0x144] sm:$0xff]
      %v851 = vld [vmem:[%s3 + $0x14c] sm:$0xf]
      %v852 = vld [vmem:[%s3 + $0x150] sm:$0xff]
      %v853 = vld [vmem:[%s3 + $0x158] sm:$0xff]
      %v854 = vld [vmem:[%s3 + $0x160] sm:$0xff]
      %v855 = vld [vmem:[%s3 + $0x168] sm:$0xf]
      %v856 = vld [vmem:[%s3 + $0x16c] sm:$0xff]
      %v857 = vld [vmem:[%s3 + $0x174] sm:$0xff]
      %v858 = vld [vmem:[%s3 + $0x17c] sm:$0xff]
      %v859 = vld [vmem:[%s3 + $0x184] sm:$0xf]
      %v860 = vld [vmem:[%s3 + $0x188] sm:$0xff]
      %v861 = vld [vmem:[%s3 + $0x190] sm:$0xff]
      %v862 = vld [vmem:[%s3 + $0x198] sm:$0xff]
      %v863 = vld [vmem:[%s3 + $0x1a0] sm:$0xf]
      %v864 = vld [vmem:[%s3 + $0x1a4] sm:$0xff]
      %v865 = vld [vmem:[%s3 + $0x1ac] sm:$0xff]
      %v866 = vld [vmem:[%s3 + $0x1b4] sm:$0xff]
      %v867 = vld [vmem:[%s3 + $0x1bc] sm:$0xf]
      %v868 = vld [vmem:[%s4] sm:$0x7f]
      %v870 = vlaneseq
      %v871 = vshrl.u32 %v870, 7
      %v872 = vsub.s32 0, %v871
      %v873 = vrot.slane %v868, %v872
      %v874 = vlaneseq
      %v875 = vshrl.u32 %v874, 7
      %v876 = vsub.s32 1, %v875
      %v877 = vrot.slane %v868, %v876
      %v878 = vlaneseq
      %v879 = vshrl.u32 %v878, 7
      %v880 = vsub.s32 2, %v879
      %v881 = vrot.slane %v868, %v880
      %v882 = vlaneseq
      %v883 = vshrl.u32 %v882, 7
      %v884 = vsub.s32 3, %v883
      %v885 = vrot.slane %v868, %v884
      %v886 = vlaneseq
      %v887 = vshrl.u32 %v886, 7
      %v888 = vsub.s32 4, %v887
      %v889 = vrot.slane %v868, %v888
      %v890 = vlaneseq
      %v891 = vshrl.u32 %v890, 7
      %v892 = vsub.s32 5, %v891
      %v893 = vrot.slane %v868, %v892
      %v894 = vlaneseq
      %v895 = vshrl.u32 %v894, 7
      %v896 = vsub.s32 6, %v895
      %v897 = vrot.slane %v868, %v896
      %v969 = vunpack.c.l.b16 %v804
      %v970 = vunpack.c.h.b16 %v804
      %v971 = vunpack.c.l.b16 %v805
      %v972 = vunpack.c.h.b16 %v805
      %v973 = vunpack.c.l.b16 %v806
      %v974 = vunpack.c.h.b16 %v806
      %v975 = vunpack.c.l.b16 %v807
      %v976 = vunpack.c.l.b16 %v808
      %v977 = vunpack.c.h.b16 %v808
      %v978 = vunpack.c.l.b16 %v809
      %v979 = vunpack.c.h.b16 %v809
      %v980 = vunpack.c.l.b16 %v810
      %v981 = vunpack.c.h.b16 %v810
      %v982 = vunpack.c.l.b16 %v811
      %v983 = vunpack.c.l.b16 %v812
      %v984 = vunpack.c.h.b16 %v812
      %v985 = vunpack.c.l.b16 %v813
      %v986 = vunpack.c.h.b16 %v813
      %v987 = vunpack.c.l.b16 %v814
      %v988 = vunpack.c.h.b16 %v814
      %v989 = vunpack.c.l.b16 %v815
      %v990 = vunpack.c.l.b16 %v816
      %v991 = vunpack.c.h.b16 %v816
      %v992 = vunpack.c.l.b16 %v817
      %v993 = vunpack.c.h.b16 %v817
      %v994 = vunpack.c.l.b16 %v818
      %v995 = vunpack.c.h.b16 %v818
      %v996 = vunpack.c.l.b16 %v819
      %v997 = vunpack.c.l.b16 %v820
      %v998 = vunpack.c.h.b16 %v820
      %v999 = vunpack.c.l.b16 %v821
      %v1000 = vunpack.c.h.b16 %v821
      %v1001 = vunpack.c.l.b16 %v822
      %v1002 = vunpack.c.h.b16 %v822
      %v1003 = vunpack.c.l.b16 %v823
      %v1004 = vunpack.c.l.b16 %v824
      %v1005 = vunpack.c.h.b16 %v824
      %v1006 = vunpack.c.l.b16 %v825
      %v1007 = vunpack.c.h.b16 %v825
      %v1008 = vunpack.c.l.b16 %v826
      %v1009 = vunpack.c.h.b16 %v826
      %v1010 = vunpack.c.l.b16 %v827
      %v1011 = vunpack.c.l.b16 %v828
      %v1012 = vunpack.c.h.b16 %v828
      %v1013 = vunpack.c.l.b16 %v829
      %v1014 = vunpack.c.h.b16 %v829
      %v1015 = vunpack.c.l.b16 %v830
      %v1016 = vunpack.c.h.b16 %v830
      %v1017 = vunpack.c.l.b16 %v831
      %v1018 = vunpack.c.l.b16 %v832
      %v1019 = vunpack.c.h.b16 %v832
      %v1020 = vunpack.c.l.b16 %v833
      %v1021 = vunpack.c.h.b16 %v833
      %v1022 = vunpack.c.l.b16 %v834
      %v1023 = vunpack.c.h.b16 %v834
      %v1024 = vunpack.c.l.b16 %v835
      %v1025 = vunpack.c.l.b16 %v836
      %v1026 = vunpack.c.h.b16 %v836
      %v1027 = vunpack.c.l.b16 %v837
      %v1028 = vunpack.c.h.b16 %v837
      %v1029 = vunpack.c.l.b16 %v838
      %v1030 = vunpack.c.h.b16 %v838
      %v1031 = vunpack.c.l.b16 %v839
      %v1032 = vunpack.c.l.b16 %v840
      %v1033 = vunpack.c.h.b16 %v840
      %v1034 = vunpack.c.l.b16 %v841
      %v1035 = vunpack.c.h.b16 %v841
      %v1036 = vunpack.c.l.b16 %v842
      %v1037 = vunpack.c.h.b16 %v842
      %v1038 = vunpack.c.l.b16 %v843
      %v1039 = vunpack.c.l.b16 %v844
      %v1040 = vunpack.c.h.b16 %v844
      %v1041 = vunpack.c.l.b16 %v845
      %v1042 = vunpack.c.h.b16 %v845
      %v1043 = vunpack.c.l.b16 %v846
      %v1044 = vunpack.c.h.b16 %v846
      %v1045 = vunpack.c.l.b16 %v847
      %v1046 = vunpack.c.l.b16 %v848
      %v1047 = vunpack.c.h.b16 %v848
      %v1048 = vunpack.c.l.b16 %v849
      %v1049 = vunpack.c.h.b16 %v849
      %v1050 = vunpack.c.l.b16 %v850
      %v1051 = vunpack.c.h.b16 %v850
      %v1052 = vunpack.c.l.b16 %v851
      %v1053 = vunpack.c.l.b16 %v852
      %v1054 = vunpack.c.h.b16 %v852
      %v1055 = vunpack.c.l.b16 %v853
      %v1056 = vunpack.c.h.b16 %v853
      %v1057 = vunpack.c.l.b16 %v854
      %v1058 = vunpack.c.h.b16 %v854
      %v1059 = vunpack.c.l.b16 %v855
      %v1060 = vunpack.c.l.b16 %v856
      %v1061 = vunpack.c.h.b16 %v856
      %v1062 = vunpack.c.l.b16 %v857
      %v1063 = vunpack.c.h.b16 %v857
      %v1064 = vunpack.c.l.b16 %v858
      %v1065 = vunpack.c.h.b16 %v858
      %v1066 = vunpack.c.l.b16 %v859
      %v1067 = vunpack.c.l.b16 %v860
      %v1068 = vunpack.c.h.b16 %v860
      %v1069 = vunpack.c.l.b16 %v861
      %v1070 = vunpack.c.h.b16 %v861
      %v1071 = vunpack.c.l.b16 %v862
      %v1072 = vunpack.c.h.b16 %v862
      %v1073 = vunpack.c.l.b16 %v863
      %v1074 = vunpack.c.l.b16 %v864
      %v1075 = vunpack.c.h.b16 %v864
      %v1076 = vunpack.c.l.b16 %v865
      %v1077 = vunpack.c.h.b16 %v865
      %v1078 = vunpack.c.l.b16 %v866
      %v1079 = vunpack.c.h.b16 %v866
      %v1080 = vunpack.c.l.b16 %v867
      %v1081 = vpack.c.b16 %v976, %v969
      %v1082 = vpack.c.b16 %v977, %v970
      %v1083 = vpack.c.b16 %v978, %v971
      %v1084 = vpack.c.b16 %v979, %v972
      %v1085 = vpack.c.b16 %v980, %v973
      %v1086 = vpack.c.b16 %v981, %v974
      %v1087 = vpack.c.b16 %v982, %v975
      %v1088 = vpack.c.b16 %v990, %v983
      %v1089 = vpack.c.b16 %v991, %v984
      %v1090 = vpack.c.b16 %v992, %v985
      %v1091 = vpack.c.b16 %v993, %v986
      %v1092 = vpack.c.b16 %v994, %v987
      %v1093 = vpack.c.b16 %v995, %v988
      %v1094 = vpack.c.b16 %v996, %v989
      %v1095 = vpack.c.b16 %v1004, %v997
      %v1096 = vpack.c.b16 %v1005, %v998
      %v1097 = vpack.c.b16 %v1006, %v999
      %v1098 = vpack.c.b16 %v1007, %v1000
      %v1099 = vpack.c.b16 %v1008, %v1001
      %v1100 = vpack.c.b16 %v1009, %v1002
      %v1101 = vpack.c.b16 %v1010, %v1003
      %v1102 = vpack.c.b16 %v1018, %v1011
      %v1103 = vpack.c.b16 %v1019, %v1012
      %v1104 = vpack.c.b16 %v1020, %v1013
      %v1105 = vpack.c.b16 %v1021, %v1014
      %v1106 = vpack.c.b16 %v1022, %v1015
      %v1107 = vpack.c.b16 %v1023, %v1016
      %v1108 = vpack.c.b16 %v1024, %v1017
      %v1109 = vpack.c.b16 %v1032, %v1025
      %v1110 = vpack.c.b16 %v1033, %v1026
      %v1111 = vpack.c.b16 %v1034, %v1027
      %v1112 = vpack.c.b16 %v1035, %v1028
      %v1113 = vpack.c.b16 %v1036, %v1029
      %v1114 = vpack.c.b16 %v1037, %v1030
      %v1115 = vpack.c.b16 %v1038, %v1031
      %v1116 = vpack.c.b16 %v1046, %v1039
      %v1117 = vpack.c.b16 %v1047, %v1040
      %v1118 = vpack.c.b16 %v1048, %v1041
      %v1119 = vpack.c.b16 %v1049, %v1042
      %v1120 = vpack.c.b16 %v1050, %v1043
      %v1121 = vpack.c.b16 %v1051, %v1044
      %v1122 = vpack.c.b16 %v1052, %v1045
      %v1123 = vpack.c.b16 %v1060, %v1053
      %v1124 = vpack.c.b16 %v1061, %v1054
      %v1125 = vpack.c.b16 %v1062, %v1055
      %v1126 = vpack.c.b16 %v1063, %v1056
      %v1127 = vpack.c.b16 %v1064, %v1057
      %v1128 = vpack.c.b16 %v1065, %v1058
      %v1129 = vpack.c.b16 %v1066, %v1059
      %v1130 = vpack.c.b16 %v1074, %v1067
      %v1131 = vpack.c.b16 %v1075, %v1068
      %v1132 = vpack.c.b16 %v1076, %v1069
      %v1133 = vpack.c.b16 %v1077, %v1070
      %v1134 = vpack.c.b16 %v1078, %v1071
      %v1135 = vpack.c.b16 %v1079, %v1072
      %v1136 = vpack.c.b16 %v1080, %v1073
      %1193 = vmatprep.subr.bf16.mxu0 %v1131
      %1194 = vmatpush1.bf16.msra.mxu0 %v1130
      %1195 = vmatprep.subr.bf16.mxu0 %v1124
      %1196 = vmatpush1.bf16.msra.mxu0 %v1123
      %1197 = vmatprep.subr.bf16.mxu0 %v1117
      %1198 = vmatpush1.bf16.msra.mxu0 %v1116
      %1199 = vmatprep.subr.bf16.mxu0 %v1110
      %1200 = vmatpush1.bf16.msra.mxu0 %v1109
      %1201 = vmatprep.subr.bf16.mxu0 %v1103
      %1202 = vmatpush1.bf16.msra.mxu0 %v1102
      %1203 = vmatprep.subr.bf16.mxu0 %v1096
      %1204 = vmatpush1.bf16.msra.mxu0 %v1095
      %1205 = vmatprep.subr.bf16.mxu0 %v1089
      %1206 = vmatpush1.bf16.msra.mxu0 %v1088
      %1207 = vmatprep.subr.bf16.mxu0 %v1082
      %1208 = vmatpush1.bf16.msra.mxu0 %v1081
      %1209 = vmatprep.subr.bf16.mxu0 0
      %1210 = vmatpush2.bf16.msra.mxu0 0
      %1211 = vmatprep.subr.bf16.mxu0 0
      %1212 = vmatpush2.bf16.msra.mxu0 0
      %1213 = vmatprep.subr.bf16.mxu0 0
      %1214 = vmatpush2.bf16.msra.mxu0 0
      %1215 = vmatprep.subr.bf16.mxu0 0
      %1216 = vmatpush2.bf16.msra.mxu0 0
      %1217 = vmatprep.subr.bf16.mxu0 0
      %1218 = vmatpush2.bf16.msra.mxu0 0
      %1219 = vmatprep.subr.bf16.mxu0 0
      %1220 = vmatpush2.bf16.msra.mxu0 0
      %1221 = vmatprep.subr.bf16.mxu0 0
      %1222 = vmatpush2.bf16.msra.mxu0 0
      %1223 = vmatprep.subr.bf16.mxu0 0
      %1224 = vmatpush2.bf16.msra.mxu0 0
      %1225 = vmatprep.mubr.bf16.mxu0 0
      %1226 = vmatmul.mubr.bf16.gmra.mxu0 %v803
      %v1227 = vpop.f32.mrf.mxu0
      %v1228 = vadd.f32 %v873, %v1227
      %v1229 = vpop.f32.mrf.mxu0
      %v1230 = vadd.f32 %v877, %v1229
      %v1231 = vpop.f32.mrf.mxu0
      %v1232 = vpop.f32.mrf.mxu0
      %1233 = vdwg.mxu0
      %1234 = vmatprep.subr.bf16.mxu0 %v1133
      %1235 = vmatpush1.bf16.msra.mxu0 %v1132
      %1236 = vmatprep.subr.bf16.mxu0 %v1126
      %1237 = vmatpush1.bf16.msra.mxu0 %v1125
      %1238 = vmatprep.subr.bf16.mxu0 %v1119
      %1239 = vmatpush1.bf16.msra.mxu0 %v1118
      %1240 = vmatprep.subr.bf16.mxu0 %v1112
      %1241 = vmatpush1.bf16.msra.mxu0 %v1111
      %1242 = vmatprep.subr.bf16.mxu0 %v1105
      %1243 = vmatpush1.bf16.msra.mxu0 %v1104
      %1244 = vmatprep.subr.bf16.mxu0 %v1098
      %1245 = vmatpush1.bf16.msra.mxu0 %v1097
      %1246 = vmatprep.subr.bf16.mxu0 %v1091
      %1247 = vmatpush1.bf16.msra.mxu0 %v1090
      %1248 = vmatprep.subr.bf16.mxu0 %v1084
      %1249 = vmatpush1.bf16.msra.mxu0 %v1083
      %1250 = vmatprep.subr.bf16.mxu0 0
      %1251 = vmatpush2.bf16.msra.mxu0 0
      %1252 = vmatprep.subr.bf16.mxu0 0
      %1253 = vmatpush2.bf16.msra.mxu0 0
      %1254 = vmatprep.subr.bf16.mxu0 0
      %1255 = vmatpush2.bf16.msra.mxu0 0
      %1256 = vmatprep.subr.bf16.mxu0 0
      %1257 = vmatpush2.bf16.msra.mxu0 0
      %1258 = vmatprep.subr.bf16.mxu0 0
      %1259 = vmatpush2.bf16.msra.mxu0 0
      %1260 = vmatprep.subr.bf16.mxu0 0
      %1261 = vmatpush2.bf16.msra.mxu0 0
      %1262 = vmatprep.subr.bf16.mxu0 0
      %1263 = vmatpush2.bf16.msra.mxu0 0
      %1264 = vmatprep.subr.bf16.mxu0 0
      %1265 = vmatpush2.bf16.msra.mxu0 0
      %1266 = vmatprep.mubr.bf16.mxu0 0
      %1267 = vmatmul.mubr.bf16.gmra.mxu0 %v803
      %v1268 = vpop.f32.mrf.mxu0
      %v1269 = vadd.f32 %v881, %v1268
      %v1270 = vpop.f32.mrf.mxu0
      %v1271 = vadd.f32 %v885, %v1270
      %v1272 = vpop.f32.mrf.mxu0
      %v1273 = vpop.f32.mrf.mxu0
      %1274 = vdwg.mxu0
      %1275 = vmatprep.subr.bf16.mxu0 %v1135
      %1276 = vmatpush1.bf16.msra.mxu0 %v1134
      %1277 = vmatprep.subr.bf16.mxu0 %v1128
      %1278 = vmatpush1.bf16.msra.mxu0 %v1127
      %1279 = vmatprep.subr.bf16.mxu0 %v1121
      %1280 = vmatpush1.bf16.msra.mxu0 %v1120
      %1281 = vmatprep.subr.bf16.mxu0 %v1114
      %1282 = vmatpush1.bf16.msra.mxu0 %v1113
      %1283 = vmatprep.subr.bf16.mxu0 %v1107
      %1284 = vmatpush1.bf16.msra.mxu0 %v1106
      %1285 = vmatprep.subr.bf16.mxu0 %v1100
      %1286 = vmatpush1.bf16.msra.mxu0 %v1099
      %1287 = vmatprep.subr.bf16.mxu0 %v1093
      %1288 = vmatpush1.bf16.msra.mxu0 %v1092
      %1289 = vmatprep.subr.bf16.mxu0 %v1086
      %1290 = vmatpush1.bf16.msra.mxu0 %v1085
      %1291 = vmatprep.subr.bf16.mxu0 0
      %1292 = vmatpush2.bf16.msra.mxu0 0
      %1293 = vmatprep.subr.bf16.mxu0 0
      %1294 = vmatpush2.bf16.msra.mxu0 0
      %1295 = vmatprep.subr.bf16.mxu0 0
      %1296 = vmatpush2.bf16.msra.mxu0 0
      %1297 = vmatprep.subr.bf16.mxu0 0
      %1298 = vmatpush2.bf16.msra.mxu0 0
      %1299 = vmatprep.subr.bf16.mxu0 0
      %1300 = vmatpush2.bf16.msra.mxu0 0
      %1301 = vmatprep.subr.bf16.mxu0 0
      %1302 = vmatpush2.bf16.msra.mxu0 0
      %1303 = vmatprep.subr.bf16.mxu0 0
      %1304 = vmatpush2.bf16.msra.mxu0 0
      %1305 = vmatprep.subr.bf16.mxu0 0
      %1306 = vmatpush2.bf16.msra.mxu0 0
      %1307 = vmatprep.mubr.bf16.mxu0 0
      %1308 = vmatmul.mubr.bf16.gmra.mxu0 %v803
      %v1309 = vpop.f32.mrf.mxu0
      %v1310 = vadd.f32 %v889, %v1309
      %v1311 = vpop.f32.mrf.mxu0
      %v1312 = vadd.f32 %v893, %v1311
      %v1313 = vpop.f32.mrf.mxu0
      %v1314 = vpop.f32.mrf.mxu0
      %1315 = vdwg.mxu0
      %1316 = vmatprep.subr.bf16.mxu0 0
      %1317 = vmatpush1.bf16.msra.mxu0 %v1136
      %1318 = vmatprep.subr.bf16.mxu0 0
      %1319 = vmatpush1.bf16.msra.mxu0 %v1129
      %1320 = vmatprep.subr.bf16.mxu0 0
      %1321 = vmatpush1.bf16.msra.mxu0 %v1122
      %1322 = vmatprep.subr.bf16.mxu0 0
      %1323 = vmatpush1.bf16.msra.mxu0 %v1115
      %1324 = vmatprep.subr.bf16.mxu0 0
      %1325 = vmatpush1.bf16.msra.mxu0 %v1108
      %1326 = vmatprep.subr.bf16.mxu0 0
      %1327 = vmatpush1.bf16.msra.mxu0 %v1101
      %1328 = vmatprep.subr.bf16.mxu0 0
      %1329 = vmatpush1.bf16.msra.mxu0 %v1094
      %1330 = vmatprep.subr.bf16.mxu0 0
      %1331 = vmatpush1.bf16.msra.mxu0 %v1087
      %1332 = vmatprep.subr.bf16.mxu0 0
      %1333 = vmatpush2.bf16.msra.mxu0 0
      %1334 = vmatprep.subr.bf16.mxu0 0
      %1335 = vmatpush2.bf16.msra.mxu0 0
      %1336 = vmatprep.subr.bf16.mxu0 0
      %1337 = vmatpush2.bf16.msra.mxu0 0
      %1338 = vmatprep.subr.bf16.mxu0 0
      %1339 = vmatpush2.bf16.msra.mxu0 0
      %1340 = vmatprep.subr.bf16.mxu0 0
      %1341 = vmatpush2.bf16.msra.mxu0 0
      %1342 = vmatprep.subr.bf16.mxu0 0
      %1343 = vmatpush2.bf16.msra.mxu0 0
      %1344 = vmatprep.subr.bf16.mxu0 0
      %1345 = vmatpush2.bf16.msra.mxu0 0
      %1346 = vmatprep.subr.bf16.mxu0 0
      %1347 = vmatpush2.bf16.msra.mxu0 0
      %1348 = vmatprep.mubr.bf16.mxu0 0
      %1349 = vmatmul.mubr.bf16.gmra.mxu0 %v803
      %v1350 = vpop.f32.mrf.mxu0
      %v1351 = vadd.f32 %v897, %v1350
      %v1352 = vpop.f32.mrf.mxu0
      %v1353 = vpop.f32.mrf.mxu0
      %v1354 = vpop.f32.mrf.mxu0
      %1355 = vdwg.mxu0
      %1356 = vst [vmem:[%s224] sm:$0xff] %v1228
      %1357 = vst [vmem:[%s224 + $0x8] sm:$0xff] %v1230
      %1358 = vst [vmem:[%s224 + $0x10] sm:$0xff] %v1269
      %1359 = vst [vmem:[%s224 + $0x18] sm:$0xff] %v1271
      %1360 = vst [vmem:[%s224 + $0x20] sm:$0xff] %v1310
      %1361 = vst [vmem:[%s224 + $0x28] sm:$0xff] %v1312
      %1362 = vst.msk [vmem:[%s224 + $0x30] sm:$0xff] %vm639, %v1351
      %p1363 = scmp.lt.s32.totalorder %s16, 1
      %s1364 = scalar_select %p1363, %s16, 1
      %s1365 = smul.addr %s1364, 7
      %s1366 = smul.addr %s1365, 8
      %s1367 = scalar_lea.vmem %s5, %s1366
      // Predicated region
      $region41: #{autoencoder_forward.1} parent=39 // pred_check
        %p1368 = pneg %p144
      $region42: #{autoencoder_forward.1} parent=39 // pred_check_branch
        %1370 = sbr.rel (%p1368) target = $region44
      $region43: #{autoencoder_forward.1} parent=39 // pred_region
        _
      $region44: #{autoencoder_forward.1} parent=39 // pred_fallthru
        _
    $region40: #{autoencoder_forward.1} parent=5 // pred_fallthru
      _
    %p1371 = scmp.le.s32.totalorder 2, %s11
    // Predicated region
    $region45: #{autoencoder_forward.1} parent=5 // pred_check
      %p1372 = pneg %p1371
    $region46: #{autoencoder_forward.1} parent=5 // pred_check_branch
      %1374 = sbr.rel (%p1372) target = $region48
    $region47: #{autoencoder_forward.1} parent=5 // pred_region
      %s1375 = ssub.s32 %s11, 2
      // Predicated region
      $region49: #{autoencoder_forward.1} parent=47 // pred_check
        %p1376 = pneg %p150
      $region50: #{autoencoder_forward.1} parent=47 // pred_check_branch
        %1378 = sbr.rel (%p1376) target = $region52
      $region51: #{autoencoder_forward.1} parent=47 // pred_region
        %p1379 = scmp.lt.s32.totalorder %s17, 1
        %s1380 = scalar_select %p1379, %s17, 1
        %s1381 = smul.addr %s1380, 7
        %s1382 = smul.addr %s1381, 8
        %s1383 = scalar_lea.vmem %s5, %s1382
      $region52: #{autoencoder_forward.1} parent=47 // pred_fallthru
        _
    $region48: #{autoencoder_forward.1} parent=5 // pred_fallthru
      _
  $region6: #{autoencoder_forward.1} parent=0 // loop_footer
    %s15 = sadd.s32 1, %s11
  $region7: #{autoencoder_forward.1} parent=0 // loop_footer_branch
    %10 = sbr.rel target = $region3
  $region8: #{autoencoder_forward.1} parent=0 // loop_exit
    _

</llo_original>
